<compile_context>
chip_gen: v6e
topology: v6e:2x2x1
jax: 0.10.0
libtpu: 0.0.40
codegen_flags: <defaults>
</compile_context>

<pallas_src>
import functools

import jax
import jax.numpy as jnp
from jax import lax
from jax.experimental import pallas as pl
from jax.experimental.pallas import tpu as pltpu


def _glu_kernel(x_ref, wa_ref, wb_ref, ba_ref, o_ref, *, bt, s):
    # x_ref:  (BT, S, Dp)  BT batch elements of the current batch block
    # wa_ref: (Dp, TN)     a-half weight columns [j*TN, (j+1)*TN)   (transposed layout)
    # wb_ref: (Dp, TN)     b/gate-half weight columns               (transposed layout)
    # ba_ref: (1, TN)      bias tile for the a-half only
    # o_ref:  (BT, S, TN)
    d = x_ref.shape[-1]

    # (BT, S, Dp) -> (BT*S, Dp): free view (S is a sublane-tile multiple when
    # BT > 1; leading-1 collapse is always free when BT == 1).
    x2 = x_ref[...].reshape(bt * s, d)               # native dtype, no upcast
    wa = wa_ref[...]
    wb = wb_ref[...]

    # Plain matmul: contract x's last dim with the weight's FIRST dim
    # (weight was pre-transposed in the wrapper) -> maps directly to the MXU.
    dn = (((1,), (0,)), ((), ()))
    b_all = lax.dot_general(x2, wb, dn, preferred_element_type=jnp.float32)  # (BT*S, TN)
    a_all = lax.dot_general(x2, wa, dn, preferred_element_type=jnp.float32)  # (BT*S, TN)

    # Hoisted bias broadcast: added once to the whole a-half (not per t).
    a_all = a_all + ba_ref[...].astype(jnp.float32)

    # Softmax over the sequence axis, independently per packed batch element.
    # bt is a small static int -> unrolled; slice starts are S-multiples and
    # S % 8 == 0 whenever bt > 1, so slices are sublane-aligned (f32).
    for t in range(bt):
        lo = t * s
        b_t = b_all[lo:lo + s, :]                    # (S, TN) f32
        m = jnp.max(b_t, axis=0, keepdims=True)      # (1, TN)
        e = jnp.exp(b_t - m)                         # (S, TN)
        denom = jnp.sum(e, axis=0, keepdims=True)    # (1, TN), >= 1
        sm = e * pl.reciprocal(denom, approx=False)  # exact EUP reciprocal

        a_t = a_all[lo:lo + s, :]                    # (S, TN)
        o_ref[t] = (a_t * (1.0 + sm)).astype(o_ref.dtype)   # a + a*softmax(b)


def glu_forward(x, weight, bias, *, tn=None, bt=None,
                vmem_budget_bytes=40 * 1024 * 1024):
    """x: (B, S, D); weight: (2D, D) (PyTorch nn.Linear layout); bias: (2D,)."""
    B, S, D = x.shape
    assert weight.shape == (2 * D, D)
    assert bias.shape == (2 * D,)

    # --- wrapper-side (one-time, cheap XLA) weight prep -----------------------
    # Transpose to (D, 2D) so the kernel does a plain K-major matmul, and split
    # into the a-half / gate-half column blocks.
    w_t = weight.T                       # (D, 2D)
    wa = w_t[:, :D]                      # (D, D)   a-half
    wb = w_t[:, D:]                      # (D, D)   gate-half
    # Gate-half bias is constant along the softmax axis (dim=1, sequence) and
    # cancels exactly inside the softmax -> only the a-half bias is needed.
    bias_a = bias[:D].reshape(1, D)

    # Pad the feature dim to a multiple of 128 so weight tiles and output
    # stores are lane-dense. Zero K-padding contributes nothing to the dot;
    # padded output columns are sliced off below.
    Dp = ((D + 127) // 128) * 128
    if Dp != D:
        pad = Dp - D
        x = jnp.pad(x, ((0, 0), (0, 0), (0, pad)))
        wa = jnp.pad(wa, ((0, pad), (0, pad)))
        wb = jnp.pad(wb, ((0, pad), (0, pad)))
        bias_a = jnp.pad(bias_a, ((0, 0), (0, pad)))

    # --- feature (N) tile: lane-dense, capped at 256 (v5e/v7x VMEM + MXU N) ---
    if tn is None:
        tn = 256 if Dp % 256 == 0 else 128
    assert Dp % tn == 0 and tn % 128 == 0
    n_tiles = Dp // tn

    # --- batch packing: fill the MXU M dim (target ~512 rows) -----------------
    itemsize = jnp.dtype(x.dtype).itemsize
    sublane = max(8, 32 // itemsize)     # 8 f32 / 16 bf16 / 32 int8
    if bt is None:
        bt = 1
        if S % sublane == 0 and B > 1:
            m_target = 512
            for cand in range(min(B, max(1, m_target // S)), 0, -1):
                if B % cand == 0:
                    bt = cand
                    break
    assert B % bt == 0

    # --- explicit VMEM budget (double-buffered footprint) ----------------------
    w_itemsize = jnp.dtype(weight.dtype).itemsize

    def footprint(bt_):
        x_blk = bt_ * S * Dp * itemsize
        w_blk = 2 * Dp * tn * w_itemsize
        b_blk = tn * 4
        o_blk = bt_ * S * tn * itemsize
        return 2 * (x_blk + w_blk + b_blk + o_blk)   # 2x: double buffering

    while bt > 1 and footprint(bt) > vmem_budget_bytes:
        nb = bt - 1
        while nb > 1 and B % nb != 0:
            nb -= 1
        bt = nb
    vmem_limit = int(min(max(footprint(bt) + (2 << 20), 4 << 20), 128 << 20))

    kernel = functools.partial(_glu_kernel, bt=bt, s=S)

    out = pl.pallas_call(
        kernel,
        out_shape=jax.ShapeDtypeStruct((B, S, Dp), x.dtype),
        grid_spec=pltpu.PrefetchScalarGridSpec(
            num_scalar_prefetch=0,
            # Feature axis OUTER, batch axis INNER: weight tiles stay resident
            # in VMEM across consecutive batch steps (only x is re-streamed).
            grid=(n_tiles, B // bt),
            in_specs=[
                # x block: varies with the inner (batch) axis only.
                pl.BlockSpec((bt, S, Dp), lambda j, i: (i, 0, 0)),
                # a-half weight columns: constant across the inner axis.
                pl.BlockSpec((Dp, tn), lambda j, i: (0, j)),
                # gate-half weight columns: constant across the inner axis.
                pl.BlockSpec((Dp, tn), lambda j, i: (0, j)),
                # a-half bias tile.
                pl.BlockSpec((1, tn), lambda j, i: (0, j)),
            ],
            out_specs=pl.BlockSpec((bt, S, tn), lambda j, i: (i, 0, j)),
        ),
        compiler_params=pltpu.CompilerParams(
            dimension_semantics=("parallel", "parallel"),
            vmem_limit_bytes=vmem_limit,
        ),
    )(x, wa, wb, bias_a)

    if Dp != D:
        out = out[..., :D]
    return out


def glu_reference(x, weight, bias):
    """Pure-JAX reference matching the PyTorch module (eval mode)."""
    y = jnp.einsum("bsd,ed->bse", x, weight) + bias
    d = x.shape[-1]
    a, b = y[..., :d], y[..., d:]
    return a + a * jax.nn.softmax(b, axis=1)


if __name__ == "__main__":
    B, S, D = 2, 8, 32  # small shapes; dropout is identity in eval mode

    key = jax.random.PRNGKey(0)
    kx, kw, kb = jax.random.split(key, 3)

    x = jax.random.normal(kx, (B, S, D), dtype=jnp.float32)
    # nn.Linear(D, 2D): weight (2D, D), bias (2D,) — deterministic synthetic init
    bound = 1.0 / (D ** 0.5)
    weight = jax.random.uniform(kw, (2 * D, D), jnp.float32, -bound, bound)
    bias = jax.random.uniform(kb, (2 * D,), jnp.float32, -bound, bound)

    out = glu_forward(x, weight, bias)
    out = jax.block_until_ready(out)

    ref = glu_reference(x, weight, bias)
    assert out.shape == (B, S, D)
    assert jnp.allclose(out, ref, atol=1e-4, rtol=1e-4), "mismatch vs reference"

    print("KERNEL_OK")
</pallas_src>

<mosaic_0001>
module attributes {stable_mosaic.version = 11 : i64} {
  func.func @_glu_kernel(%arg0: i32, %arg1: i32, %arg2: memref<2x8x128xf32, #tpu.memory_space<vmem>>, %arg3: memref<128x128xf32, #tpu.memory_space<vmem>>, %arg4: memref<128x128xf32, #tpu.memory_space<vmem>>, %arg5: memref<1x128xf32, #tpu.memory_space<vmem>>, %arg6: memref<2x8x128xf32, #tpu.memory_space<vmem>>) attributes {dimension_semantics = [#tpu.dimension_semantics<parallel>, #tpu.dimension_semantics<parallel>], iteration_bounds = array<i64: 1, 1>, scalar_prefetch = 0 : i64, scratch_operands = 0 : i64, tpu.core_type = #tpu.core_type<tc>, window_params = [{transform_indices = @transform_0, window_bounds = array<i64: 2, 8, 128>}, {transform_indices = @transform_1, window_bounds = array<i64: 128, 128>}, {transform_indices = @transform_2, window_bounds = array<i64: 128, 128>}, {transform_indices = @transform_3, window_bounds = array<i64: 1, 128>}, {transform_indices = @transform_4, window_bounds = array<i64: 2, 8, 128>}]} {
    %c0 = arith.constant 0 : index
    %c0_0 = arith.constant 0 : index
    %c0_1 = arith.constant 0 : index
    %0 = vector.load %arg2[%c0, %c0_0, %c0_1] : memref<2x8x128xf32, #tpu.memory_space<vmem>>, vector<2x8x128xf32>
    %1 = vector.shape_cast %0 : vector<2x8x128xf32> to vector<16x128xf32>
    %c0_2 = arith.constant 0 : index
    %c0_3 = arith.constant 0 : index
    %2 = vector.load %arg3[%c0_2, %c0_3] : memref<128x128xf32, #tpu.memory_space<vmem>>, vector<128x128xf32>
    %c0_4 = arith.constant 0 : index
    %c0_5 = arith.constant 0 : index
    %3 = vector.load %arg4[%c0_4, %c0_5] : memref<128x128xf32, #tpu.memory_space<vmem>>, vector<128x128xf32>
    %cst = arith.constant dense<0.000000e+00> : vector<16x128xf32>
    %4 = tpu.matmul %1, %3, %cst {dimension_numbers = #tpu.dot_dimension_numbers<[1], [0], [0], [1], [0, 0, 1, 1], [], []>} : vector<16x128xf32>, vector<128x128xf32>, vector<16x128xf32> -> vector<16x128xf32>
    %cst_6 = arith.constant dense<0.000000e+00> : vector<16x128xf32>
    %5 = tpu.matmul %1, %2, %cst_6 {dimension_numbers = #tpu.dot_dimension_numbers<[1], [0], [0], [1], [0, 0, 1, 1], [], []>} : vector<16x128xf32>, vector<128x128xf32>, vector<16x128xf32> -> vector<16x128xf32>
    %c0_7 = arith.constant 0 : index
    %c0_8 = arith.constant 0 : index
    %6 = vector.load %arg5[%c0_7, %c0_8] : memref<1x128xf32, #tpu.memory_space<vmem>>, vector<1x128xf32>
    %7 = vector.broadcast %6 : vector<1x128xf32> to vector<16x128xf32>
    %8 = arith.addf %5, %7 : vector<16x128xf32>
    %9 = vector.extract_strided_slice %4 {offsets = [0, 0], sizes = [8, 128], strides = [1, 1]} : vector<16x128xf32> to vector<8x128xf32>
    %cst_9 = arith.constant dense<0xFF800000> : vector<128xf32>
    %10 = vector.multi_reduction <maximumf>, %9, %cst_9 [0] : vector<8x128xf32> to vector<128xf32>
    %11 = vector.shape_cast %10 : vector<128xf32> to vector<1x128xf32>
    %12 = vector.broadcast %11 : vector<1x128xf32> to vector<8x128xf32>
    %13 = arith.subf %9, %12 : vector<8x128xf32>
    %14 = math.exp %13 : vector<8x128xf32>
    %cst_10 = arith.constant dense<0.000000e+00> : vector<128xf32>
    %15 = vector.multi_reduction <add>, %14, %cst_10 [0] : vector<8x128xf32> to vector<128xf32>
    %16 = vector.shape_cast %15 : vector<128xf32> to vector<1x128xf32>
    %17 = tpu.reciprocal %16 : vector<1x128xf32> -> vector<1x128xf32>
    %18 = vector.broadcast %17 : vector<1x128xf32> to vector<8x128xf32>
    %19 = arith.mulf %14, %18 : vector<8x128xf32>
    %20 = vector.extract_strided_slice %8 {offsets = [0, 0], sizes = [8, 128], strides = [1, 1]} : vector<16x128xf32> to vector<8x128xf32>
    %cst_11 = arith.constant 1.000000e+00 : f32
    %21 = vector.broadcast %cst_11 : f32 to vector<8x128xf32>
    %22 = arith.addf %21, %19 : vector<8x128xf32>
    %23 = arith.mulf %20, %22 : vector<8x128xf32>
    %c0_12 = arith.constant 0 : index
    %c0_13 = arith.constant 0 : index
    %c0_14 = arith.constant 0 : index
    %24 = vector.load %arg6[%c0_12, %c0_13, %c0_14] : memref<2x8x128xf32, #tpu.memory_space<vmem>>, vector<1x8x128xf32>
    %25 = vector.shape_cast %24 : vector<1x8x128xf32> to vector<8x128xf32>
    %26 = vector.shape_cast %23 : vector<8x128xf32> to vector<1x8x128xf32>
    tpu.vector_store %arg6[%c0_12, %c0_13, %c0_14], %26 {strides = array<i32>} : memref<2x8x128xf32, #tpu.memory_space<vmem>>, vector<1x8x128xf32>,
    %27 = vector.extract_strided_slice %4 {offsets = [8, 0], sizes = [8, 128], strides = [1, 1]} : vector<16x128xf32> to vector<8x128xf32>
    %cst_15 = arith.constant dense<0xFF800000> : vector<128xf32>
    %28 = vector.multi_reduction <maximumf>, %27, %cst_15 [0] : vector<8x128xf32> to vector<128xf32>
    %29 = vector.shape_cast %28 : vector<128xf32> to vector<1x128xf32>
    %30 = vector.broadcast %29 : vector<1x128xf32> to vector<8x128xf32>
    %31 = arith.subf %27, %30 : vector<8x128xf32>
    %32 = math.exp %31 : vector<8x128xf32>
    %cst_16 = arith.constant dense<0.000000e+00> : vector<128xf32>
    %33 = vector.multi_reduction <add>, %32, %cst_16 [0] : vector<8x128xf32> to vector<128xf32>
    %34 = vector.shape_cast %33 : vector<128xf32> to vector<1x128xf32>
    %35 = tpu.reciprocal %34 : vector<1x128xf32> -> vector<1x128xf32>
    %36 = vector.broadcast %35 : vector<1x128xf32> to vector<8x128xf32>
    %37 = arith.mulf %32, %36 : vector<8x128xf32>
    %38 = vector.extract_strided_slice %8 {offsets = [8, 0], sizes = [8, 128], strides = [1, 1]} : vector<16x128xf32> to vector<8x128xf32>
    %cst_17 = arith.constant 1.000000e+00 : f32
    %39 = vector.broadcast %cst_17 : f32 to vector<8x128xf32>
    %40 = arith.addf %39, %37 : vector<8x128xf32>
    %41 = arith.mulf %38, %40 : vector<8x128xf32>
    %c1 = arith.constant 1 : index
    %c0_18 = arith.constant 0 : index
    %c0_19 = arith.constant 0 : index
    %42 = vector.load %arg6[%c1, %c0_18, %c0_19] : memref<2x8x128xf32, #tpu.memory_space<vmem>>, vector<1x8x128xf32>
    %43 = vector.shape_cast %42 : vector<1x8x128xf32> to vector<8x128xf32>
    %44 = vector.shape_cast %41 : vector<8x128xf32> to vector<1x8x128xf32>
    tpu.vector_store %arg6[%c1, %c0_18, %c0_19], %44 {strides = array<i32>} : memref<2x8x128xf32, #tpu.memory_space<vmem>>, vector<1x8x128xf32>,
    return
  }
  func.func @transform_0(%arg0: i32, %arg1: i32) -> (i32, i32, i32) {
    %c0_i32 = arith.constant 0 : i32
    %c0_i32_0 = arith.constant 0 : i32
    %c0_i32_1 = arith.constant 0 : i32
    return %arg1, %c0_i32, %c0_i32_0 : i32, i32, i32
  }
  func.func @transform_1(%arg0: i32, %arg1: i32) -> (i32, i32) {
    %c0_i32 = arith.constant 0 : i32
    %c0_i32_0 = arith.constant 0 : i32
    return %c0_i32, %arg0 : i32, i32
  }
  func.func @transform_2(%arg0: i32, %arg1: i32) -> (i32, i32) {
    %c0_i32 = arith.constant 0 : i32
    %c0_i32_0 = arith.constant 0 : i32
    return %c0_i32, %arg0 : i32, i32
  }
  func.func @transform_3(%arg0: i32, %arg1: i32) -> (i32, i32) {
    %c0_i32 = arith.constant 0 : i32
    %c0_i32_0 = arith.constant 0 : i32
    return %c0_i32, %arg0 : i32, i32
  }
  func.func @transform_4(%arg0: i32, %arg1: i32) -> (i32, i32, i32) {
    %c0_i32 = arith.constant 0 : i32
    %c0_i32_0 = arith.constant 0 : i32
    return %arg1, %c0_i32, %arg0 : i32, i32, i32
  }
}

</mosaic_0001>

<llo_original>
// kernel: tpu_custom_call.1
$region0: #{tpu_custom_call.1}
  #allocation0 [shape = 'u32[]', space=smem, size = 0x4, offset = 0x4, fixed_abs, tag = 'smem constant byte address 0x4 - core index']
  #allocation1 [shape = 'u32[144,128]{1,0:T(1,128)}', space=vmem, size = 0x12000, scoped, tag = 'internal scratch']
  %s0 = inlined_call_operand.hbm [shape: f32[2,8,128], index: 0, kind: input, shape index: {}]
  %s1 = inlined_call_operand.hbm [shape: f32[128,128], index: 1, kind: input, shape index: {}]
  %s2 = inlined_call_operand.hbm [shape: f32[128,128], index: 2, kind: input, shape index: {}]
  %s3 = inlined_call_operand.vmem [shape: f32[1,128], index: 3, kind: input, shape index: {}]
  %s4 = inlined_call_operand.hbm [shape: f32[2,8,128], index: 4, kind: output, shape index: {}]
  %s5 = sld [smem:[#allocation0]]
  $region38: #{tpu_custom_call.1} parent=0
    _
  %s7 = ssub.s32 1, %s5
  %s8 = scalar_select 0, %s7, %s5
  $region1: #{tpu_custom_call.1} parent=0
    #allocation2 [shape = 'u8[8192]{0}', space=vmem, size = 0x2000, scoped, tag = 'input window, operand 0, single buffered']
    #allocation3 [shape = 's32[1]{0}', space=sflag, size = 0x4, scoped, tag = 'scoped memory for tpu_custom_call.1']
    #allocation4 [shape = 's32[1]{0}', space=sflag, size = 0x4, scoped, tag = 'scoped memory for tpu_custom_call.1']
    #allocation5 [shape = 'u8[65536]{0}', space=vmem, size = 0x10000, scoped, tag = 'input window, operand 1, single buffered']
    #allocation6 [shape = 's32[1]{0}', space=sflag, size = 0x4, scoped, tag = 'scoped memory for tpu_custom_call.1']
    #allocation7 [shape = 'u8[65536]{0}', space=vmem, size = 0x10000, scoped, tag = 'input window, operand 2, single buffered']
    #allocation8 [shape = 'u8[8192]{0}', space=vmem, size = 0x2000, scoped, tag = 'output window, operand 0, single buffered']
    %9 = vsyncpa [#allocation3], 0
    %10 = vsyncpa [#allocation6], 0
    %11 = vsyncpa [#allocation4], 0
    // Predicated region
    $region2: #{tpu_custom_call.1} parent=1 // pred_check
      _
    $region3: #{tpu_custom_call.1} parent=1 // pred_check_branch
      %13 = sbr.rel (0) target = $region5
    $region4: #{tpu_custom_call.1} parent=1 // pred_region
      %s15 = ssub.s32 256, 256
      %16 = vsyncadd [#allocation3], %s15
      %s17 = sshll.u32 [#allocation2], 4
      %s18 = int_to_ptr.vmem [resolvable:$true] %s17
      %23 = dma.hbm_to_vmem [thread:$0]  %s0, 256, %s18, [#allocation3], 128, 128, 8
    $region5: #{tpu_custom_call.1} parent=1 // pred_fallthru
      _
    // Predicated region
    $region6: #{tpu_custom_call.1} parent=1 // pred_check
      _
    $region7: #{tpu_custom_call.1} parent=1 // pred_check_branch
      %25 = sbr.rel (0) target = $region9
    $region8: #{tpu_custom_call.1} parent=1 // pred_region
      %s27 = ssub.s32 2048, 2048
      %28 = vsyncadd [#allocation6], %s27
      %s29 = sshll.u32 [#allocation5], 4
      %s30 = int_to_ptr.vmem [resolvable:$true] %s29
      %35 = dma.hbm_to_vmem [thread:$0]  %s1, 2048, %s30, [#allocation6], 128, 128, 8
    $region9: #{tpu_custom_call.1} parent=1 // pred_fallthru
      _
    // Predicated region
    $region10: #{tpu_custom_call.1} parent=1 // pred_check
      _
    $region11: #{tpu_custom_call.1} parent=1 // pred_check_branch
      %37 = sbr.rel (0) target = $region13
    $region12: #{tpu_custom_call.1} parent=1 // pred_region
      %s39 = ssub.s32 2048, 2048
      %40 = vsyncadd [#allocation6], %s39
      %s41 = sshll.u32 [#allocation7], 4
      %s42 = int_to_ptr.vmem [resolvable:$true] %s41
      %47 = dma.hbm_to_vmem [thread:$0]  %s2, 2048, %s42, [#allocation6], 128, 128, 8
    $region13: #{tpu_custom_call.1} parent=1 // pred_fallthru
      _
    // Predicated region
    $region14: #{tpu_custom_call.1} parent=1 // pred_check
      _
    $region15: #{tpu_custom_call.1} parent=1 // pred_check_branch
      %49 = sbr.rel (0) target = $region17
    $region16: #{tpu_custom_call.1} parent=1 // pred_region
      _
    $region17: #{tpu_custom_call.1} parent=1 // pred_fallthru
      _
    // Predicated region
    $region18: #{tpu_custom_call.1} parent=1 // pred_check
      _
    $region19: #{tpu_custom_call.1} parent=1 // pred_check_branch
      %51 = sbr.rel (0) target = $region21
    $region20: #{tpu_custom_call.1} parent=1 // pred_region
      %52 = dma.done [#allocation3], 256
    $region21: #{tpu_custom_call.1} parent=1 // pred_fallthru
      _
    // Predicated region
    $region22: #{tpu_custom_call.1} parent=1 // pred_check
      _
    $region23: #{tpu_custom_call.1} parent=1 // pred_check_branch
      %54 = sbr.rel (0) target = $region25
    $region24: #{tpu_custom_call.1} parent=1 // pred_region
      %55 = dma.done [#allocation6], 2048
    $region25: #{tpu_custom_call.1} parent=1 // pred_fallthru
      _
    // Predicated region
    $region26: #{tpu_custom_call.1} parent=1 // pred_check
      _
    $region27: #{tpu_custom_call.1} parent=1 // pred_check_branch
      %57 = sbr.rel (0) target = $region29
    $region28: #{tpu_custom_call.1} parent=1 // pred_region
      %58 = dma.done [#allocation6], 2048
    $region29: #{tpu_custom_call.1} parent=1 // pred_fallthru
      _
    %v59 = vld [vmem:[#allocation2] sm:$0xff]
    %v60 = vld [vmem:[#allocation2 + $0x8] sm:$0xff]
    %v61 = vld [vmem:[#allocation5] sm:$0xff]
    %v62 = vld [vmem:[#allocation5 + $0x8] sm:$0xff]
    %v63 = vld [vmem:[#allocation5 + $0x10] sm:$0xff]
    %v64 = vld [vmem:[#allocation5 + $0x18] sm:$0xff]
    %v65 = vld [vmem:[#allocation5 + $0x20] sm:$0xff]
    %v66 = vld [vmem:[#allocation5 + $0x28] sm:$0xff]
    %v67 = vld [vmem:[#allocation5 + $0x30] sm:$0xff]
    %v68 = vld [vmem:[#allocation5 + $0x38] sm:$0xff]
    %v69 = vld [vmem:[#allocation5 + $0x40] sm:$0xff]
    %v70 = vld [vmem:[#allocation5 + $0x48] sm:$0xff]
    %v71 = vld [vmem:[#allocation5 + $0x50] sm:$0xff]
    %v72 = vld [vmem:[#allocation5 + $0x58] sm:$0xff]
    %v73 = vld [vmem:[#allocation5 + $0x60] sm:$0xff]
    %v74 = vld [vmem:[#allocation5 + $0x68] sm:$0xff]
    %v75 = vld [vmem:[#allocation5 + $0x70] sm:$0xff]
    %v76 = vld [vmem:[#allocation5 + $0x78] sm:$0xff]
    %v77 = vld [vmem:[#allocation7] sm:$0xff]
    %v78 = vld [vmem:[#allocation7 + $0x8] sm:$0xff]
    %v79 = vld [vmem:[#allocation7 + $0x10] sm:$0xff]
    %v80 = vld [vmem:[#allocation7 + $0x18] sm:$0xff]
    %v81 = vld [vmem:[#allocation7 + $0x20] sm:$0xff]
    %v82 = vld [vmem:[#allocation7 + $0x28] sm:$0xff]
    %v83 = vld [vmem:[#allocation7 + $0x30] sm:$0xff]
    %v84 = vld [vmem:[#allocation7 + $0x38] sm:$0xff]
    %v85 = vld [vmem:[#allocation7 + $0x40] sm:$0xff]
    %v86 = vld [vmem:[#allocation7 + $0x48] sm:$0xff]
    %v87 = vld [vmem:[#allocation7 + $0x50] sm:$0xff]
    %v88 = vld [vmem:[#allocation7 + $0x58] sm:$0xff]
    %v89 = vld [vmem:[#allocation7 + $0x60] sm:$0xff]
    %v90 = vld [vmem:[#allocation7 + $0x68] sm:$0xff]
    %v91 = vld [vmem:[#allocation7 + $0x70] sm:$0xff]
    %v92 = vld [vmem:[#allocation7 + $0x78] sm:$0xff]
    %93 = vmatprep.subr.mxu0 0.0
    %94 = vmatpush1.msra.mxu0 %v92
    %95 = vmatprep.subr.mxu0 0.0
    %96 = vmatpush1.msra.mxu0 %v91
    %97 = vmatprep.subr.mxu0 0.0
    %98 = vmatpush1.msra.mxu0 %v90
    %99 = vmatprep.subr.mxu0 0.0
    %100 = vmatpush1.msra.mxu0 %v89
    %101 = vmatprep.subr.mxu0 0.0
    %102 = vmatpush1.msra.mxu0 %v88
    %103 = vmatprep.subr.mxu0 0.0
    %104 = vmatpush1.msra.mxu0 %v87
    %105 = vmatprep.subr.mxu0 0.0
    %106 = vmatpush1.msra.mxu0 %v86
    %107 = vmatprep.subr.mxu0 0.0
    %108 = vmatpush1.msra.mxu0 %v85
    %109 = vmatprep.subr.mxu0 0.0
    %110 = vmatpush1.msra.mxu0 %v84
    %111 = vmatprep.subr.mxu0 0.0
    %112 = vmatpush1.msra.mxu0 %v83
    %113 = vmatprep.subr.mxu0 0.0
    %114 = vmatpush1.msra.mxu0 %v82
    %115 = vmatprep.subr.mxu0 0.0
    %116 = vmatpush1.msra.mxu0 %v81
    %117 = vmatprep.subr.mxu0 0.0
    %118 = vmatpush1.msra.mxu0 %v80
    %119 = vmatprep.subr.mxu0 0.0
    %120 = vmatpush1.msra.mxu0 %v79
    %121 = vmatprep.subr.mxu0 0.0
    %122 = vmatpush1.msra.mxu0 %v78
    %123 = vmatprep.subr.mxu0 0.0
    %124 = vmatpush1.msra.mxu0 %v77
    %125 = vmatprep.subr.mxu0 0.0
    %126 = vmatpush2.msra.mxu0 0.0
    %127 = vmatprep.subr.mxu0 0.0
    %128 = vmatpush2.msra.mxu0 0.0
    %129 = vmatprep.subr.mxu0 0.0
    %130 = vmatpush2.msra.mxu0 0.0
    %131 = vmatprep.subr.mxu0 0.0
    %132 = vmatpush2.msra.mxu0 0.0
    %133 = vmatprep.subr.mxu0 0.0
    %134 = vmatpush2.msra.mxu0 0.0
    %135 = vmatprep.subr.mxu0 0.0
    %136 = vmatpush2.msra.mxu0 0.0
    %137 = vmatprep.subr.mxu0 0.0
    %138 = vmatpush2.msra.mxu0 0.0
    %139 = vmatprep.subr.mxu0 0.0
    %140 = vmatpush2.msra.mxu0 0.0
    %141 = vmatprep.subr.mxu0 0.0
    %142 = vmatpush2.msra.mxu0 0.0
    %143 = vmatprep.subr.mxu0 0.0
    %144 = vmatpush2.msra.mxu0 0.0
    %145 = vmatprep.subr.mxu0 0.0
    %146 = vmatpush2.msra.mxu0 0.0
    %147 = vmatprep.subr.mxu0 0.0
    %148 = vmatpush2.msra.mxu0 0.0
    %149 = vmatprep.subr.mxu0 0.0
    %150 = vmatpush2.msra.mxu0 0.0
    %151 = vmatprep.subr.mxu0 0.0
    %152 = vmatpush2.msra.mxu0 0.0
    %153 = vmatprep.subr.mxu0 0.0
    %154 = vmatpush2.msra.mxu0 0.0
    %155 = vmatprep.subr.mxu0 0.0
    %156 = vmatpush2.msra.mxu0 0.0
    %157 = vmatprep.mubr.f32.mxu0 0.0
    %158 = vmatmul.mubr.f32.gmra.mxu0 %v59
    %v159 = vpop.f32.mrf.mxu0
    %v160 = vadd.f32 0.0, %v159
    %v161 = vpop.f32.mrf.mxu0
    %162 = vmatprep.mubr.f32.mxu0 0.0
    %163 = vmatmul.mubr.f32.gmra.mxu0 %v60
    %v164 = vpop.f32.mrf.mxu0
    %v165 = vadd.f32 0.0, %v164
    %v166 = vpop.f32.mrf.mxu0
    %167 = vdwg.mxu0
    %v168 = vld [vmem:[%s3] sm:$0x1]
    %v170 = vlaneseq
    %v171 = vshrl.u32 %v170, 7
    %v172 = vsub.s32 0, %v171
    %v173 = vrot.slane %v168, %v172
    %175 = vmatprep.subr.mxu0 0.0
    %176 = vmatpush1.msra.mxu0 %v76
    %177 = vmatprep.subr.mxu0 0.0
    %178 = vmatpush1.msra.mxu0 %v75
    %179 = vmatprep.subr.mxu0 0.0
    %180 = vmatpush1.msra.mxu0 %v74
    %181 = vmatprep.subr.mxu0 0.0
    %182 = vmatpush1.msra.mxu0 %v73
    %183 = vmatprep.subr.mxu0 0.0
    %184 = vmatpush1.msra.mxu0 %v72
    %185 = vmatprep.subr.mxu0 0.0
    %186 = vmatpush1.msra.mxu0 %v71
    %187 = vmatprep.subr.mxu0 0.0
    %188 = vmatpush1.msra.mxu0 %v70
    %189 = vmatprep.subr.mxu0 0.0
    %190 = vmatpush1.msra.mxu0 %v69
    %191 = vmatprep.subr.mxu0 0.0
    %192 = vmatpush1.msra.mxu0 %v68
    %193 = vmatprep.subr.mxu0 0.0
    %194 = vmatpush1.msra.mxu0 %v67
    %195 = vmatprep.subr.mxu0 0.0
    %196 = vmatpush1.msra.mxu0 %v66
    %197 = vmatprep.subr.mxu0 0.0
    %198 = vmatpush1.msra.mxu0 %v65
    %199 = vmatprep.subr.mxu0 0.0
    %200 = vmatpush1.msra.mxu0 %v64
    %201 = vmatprep.subr.mxu0 0.0
    %202 = vmatpush1.msra.mxu0 %v63
    %203 = vmatprep.subr.mxu0 0.0
    %204 = vmatpush1.msra.mxu0 %v62
    %205 = vmatprep.subr.mxu0 0.0
    %206 = vmatpush1.msra.mxu0 %v61
    %207 = vmatprep.subr.mxu0 0.0
    %208 = vmatpush2.msra.mxu0 0.0
    %209 = vmatprep.subr.mxu0 0.0
    %210 = vmatpush2.msra.mxu0 0.0
    %211 = vmatprep.subr.mxu0 0.0
    %212 = vmatpush2.msra.mxu0 0.0
    %213 = vmatprep.subr.mxu0 0.0
    %214 = vmatpush2.msra.mxu0 0.0
    %215 = vmatprep.subr.mxu0 0.0
    %216 = vmatpush2.msra.mxu0 0.0
    %217 = vmatprep.subr.mxu0 0.0
    %218 = vmatpush2.msra.mxu0 0.0
    %219 = vmatprep.subr.mxu0 0.0
    %220 = vmatpush2.msra.mxu0 0.0
    %221 = vmatprep.subr.mxu0 0.0
    %222 = vmatpush2.msra.mxu0 0.0
    %223 = vmatprep.subr.mxu0 0.0
    %224 = vmatpush2.msra.mxu0 0.0
    %225 = vmatprep.subr.mxu0 0.0
    %226 = vmatpush2.msra.mxu0 0.0
    %227 = vmatprep.subr.mxu0 0.0
    %228 = vmatpush2.msra.mxu0 0.0
    %229 = vmatprep.subr.mxu0 0.0
    %230 = vmatpush2.msra.mxu0 0.0
    %231 = vmatprep.subr.mxu0 0.0
    %232 = vmatpush2.msra.mxu0 0.0
    %233 = vmatprep.subr.mxu0 0.0
    %234 = vmatpush2.msra.mxu0 0.0
    %235 = vmatprep.subr.mxu0 0.0
    %236 = vmatpush2.msra.mxu0 0.0
    %237 = vmatprep.subr.mxu0 0.0
    %238 = vmatpush2.msra.mxu0 0.0
    %239 = vmatprep.mubr.f32.mxu0 0.0
    %240 = vmatmul.mubr.f32.gmra.mxu0 %v59
    %v241 = vpop.f32.mrf.mxu0
    %v242 = vadd.f32 %v173, %v241
    %v243 = vpop.f32.mrf.mxu0
    %244 = vmatprep.mubr.f32.mxu0 0.0
    %245 = vmatmul.mubr.f32.gmra.mxu0 %v60
    %v246 = vpop.f32.mrf.mxu0
    %v247 = vadd.f32 %v173, %v246
    %v248 = vpop.f32.mrf.mxu0
    %249 = vdwg.mxu0
    %v250 = vrot.slane %v160, 4
    %v251 = vmax.f32 %v160, %v250
    %v252 = vrot.slane %v251, 2
    %v253 = vmax.f32 %v251, %v252
    %v254 = vrot.slane %v253, 1
    %v255 = vmax.f32 %v253, %v254
    %v256 = vsub.f32 %v160, %v255
    %v257 = vmul.f32 %v256, 1.442695
    %v258 = vpow.pop %v257
    %v259 = vrot.slane %v258, 4
    %v260 = vadd.f32 %v258, %v259
    %v261 = vrot.slane %v260, 2
    %v262 = vadd.f32 %v260, %v261
    %v263 = vrot.slane %v262, 1
    %v264 = vadd.f32 %v262, %v263
    %v265 = vrcp.pop %v264
    %v266 = vmul.f32 %v258, %v265
    %v267 = vadd.f32 %v266, 1.0
    %v268 = vmul.f32 %v242, %v267
    %269 = vst [vmem:[#allocation8] sm:$0xff] %v268
    %v270 = vrot.slane %v165, 4
    %v271 = vmax.f32 %v165, %v270
    %v272 = vrot.slane %v271, 2
    %v273 = vmax.f32 %v271, %v272
    %v274 = vrot.slane %v273, 1
    %v275 = vmax.f32 %v273, %v274
    %v276 = vsub.f32 %v165, %v275
    %v277 = vmul.f32 %v276, 1.442695
    %v278 = vpow.pop %v277
    %v279 = vrot.slane %v278, 4
    %v280 = vadd.f32 %v278, %v279
    %v281 = vrot.slane %v280, 2
    %v282 = vadd.f32 %v280, %v281
    %v283 = vrot.slane %v282, 1
    %v284 = vadd.f32 %v282, %v283
    %v285 = vrcp.pop %v284
    %v286 = vmul.f32 %v278, %v285
    %v287 = vadd.f32 %v286, 1.0
    %v288 = vmul.f32 %v247, %v287
    %s289 = scalar_lea.vmem [#allocation8], 8
    %290 = vst [vmem:[%s289] sm:$0xff] %v288
    // Predicated region
    $region30: #{tpu_custom_call.1} parent=1 // pred_check
      _
    $region31: #{tpu_custom_call.1} parent=1 // pred_check_branch
      %292 = sbr.rel (0) target = $region33
    $region32: #{tpu_custom_call.1} parent=1 // pred_region
      %s294 = ssub.s32 256, 256
      %295 = vsyncadd [#allocation4], %s294
      %s296 = sshll.u32 [#allocation8], 4
      %s297 = int_to_ptr.vmem [resolvable:$true] %s296
      %302 = dma.vmem_to_hbm [thread:$0]  %s297, 256, %s4, [#allocation4], 128, 128, 8
    $region33: #{tpu_custom_call.1} parent=1 // pred_fallthru
      _
    // Predicated region
    $region34: #{tpu_custom_call.1} parent=1 // pred_check
      _
    $region35: #{tpu_custom_call.1} parent=1 // pred_check_branch
      %304 = sbr.rel (0) target = $region37
    $region36: #{tpu_custom_call.1} parent=1 // pred_region
      %305 = dma.done [#allocation4], 256
    $region37: #{tpu_custom_call.1} parent=1 // pred_fallthru
      _
    %306 = vsyncpa [#allocation3], 1
    %307 = vsyncpa [#allocation6], 1
    %308 = vsyncpa [#allocation4], 1

</llo_original>
